<compile_context>
chip_gen: v5e
topology: v5e:2x2
jax: 0.10.0
libtpu: 0.0.40
codegen_flags: <defaults>
</compile_context>

<pallas_src>
import functools

import numpy as np
import jax
import jax.numpy as jnp
from jax.experimental import pallas as pl
from jax.experimental.pallas import tpu as pltpu


def _cbam_kernel(x_ref, mask_ref, w1_ref, b1_ref, w2_ref, b2_ref, cw_ref, cb_ref,
                 out_ref, *, C, H, W, k):
    p = (k - 1) // 2
    HW = H * W
    x = x_ref[0]                                   # (C, H*W) float32, lane-dense

    # ---------------- Channel attention (fused avg/max through shared MLP) ----
    avg = jnp.mean(x, axis=1, keepdims=True)       # (C, 1)  spatial avg pool
    mx = jnp.max(x, axis=1, keepdims=True)         # (C, 1)  spatial max pool
    col2 = jax.lax.broadcasted_iota(jnp.int32, (C, 2), 1)
    pooled = jnp.where(col2 == 0, avg, mx)         # (C, 2): col0 = avg, col1 = max

    h = jnp.dot(w1_ref[...], pooled, preferred_element_type=jnp.float32) + b1_ref[...]
    h = jnp.maximum(h, 0.0)                        # (mid, 2)
    o = jnp.dot(w2_ref[...], h, preferred_element_type=jnp.float32) + b2_ref[...]
    # bottleneck(avg) + bottleneck(max); b2 counted twice, exactly as in the torch module
    chan_att = jax.nn.sigmoid(jnp.sum(o, axis=1, keepdims=True))    # (C, 1)

    fp = x * chan_att                              # (C, H*W)

    # ---------------- Spatial attention (roll-based shift-MAC conv) -----------
    mx_map = jnp.max(fp, axis=0, keepdims=True)    # (1, H*W) channel-max map
    avg_map = jnp.mean(fp, axis=0, keepdims=True)  # (1, H*W) channel-mean map

    acc = jnp.zeros((1, HW), jnp.float32) + cb_ref[0]
    for dy in range(k):
        for dx in range(k):
            tap = dy * k + dx
            off = (dy - p) * W + (dx - p)          # flat source offset for this tap
            w_max = cw_ref[tap]                    # conv in-channel 0 = max (torch cat order)
            w_avg = cw_ref[k * k + tap]            # conv in-channel 1 = avg
            if off == 0:
                acc = acc + w_max * mx_map + w_avg * avg_map
            else:
                s = (-off) % HW                    # rolled[i] == map[(i + off) mod HW]
                sh_max = pltpu.roll(mx_map, shift=s, axis=1)
                sh_avg = pltpu.roll(avg_map, shift=s, axis=1)
                contrib = w_max * sh_max + w_avg * sh_avg
                valid = mask_ref[pl.ds(tap, 1), :] != 0.0   # zero-padding border mask
                acc = acc + jnp.where(valid, contrib, 0.0)

    spat_att = jax.nn.sigmoid(acc)                 # (1, H*W)
    out_ref[0] = (fp * spat_att).astype(out_ref.dtype)


def cbam_pallas(x, params, *, kernel_size):
    """x: (B, C, H, W) float32; params = (w1, b1, w2, b2, conv_w_flat, conv_b)."""
    B, C, H, W = x.shape
    w1, b1, w2, b2, conv_w, conv_b = params
    k = kernel_size
    assert k % 2 == 1, "Odd kernel size required (matches the PyTorch module)"
    p = (k - 1) // 2
    mid = w1.shape[0]
    HW = H * W

    # Precomputed per-tap validity masks of the zero-padded k x k conv, laid out in
    # the flat lane-dense (H*W) coordinate (constant, shared by all batch elements).
    yy, xx = np.meshgrid(np.arange(H), np.arange(W), indexing="ij")
    taps = []
    for dy in range(k):
        for dx in range(k):
            valid = ((yy + dy - p >= 0) & (yy + dy - p < H) &
                     (xx + dx - p >= 0) & (xx + dx - p < W))
            taps.append(valid.reshape(-1))
    mask = jnp.asarray(np.stack(taps).astype(np.float32))        # (k*k, H*W)

    x_flat = x.reshape(B, C, HW)

    kern = functools.partial(_cbam_kernel, C=C, H=H, W=W, k=k)

    def full(shape):
        return pl.BlockSpec(shape, lambda b: (0,) * len(shape))

    cost = pl.CostEstimate(
        flops=B * (6 * C * HW + 4 * k * k * HW + 8 * mid * C),
        transcendentals=B * (HW + C),
        bytes_accessed=2 * B * C * HW * 4,
    )

    out_flat = pl.pallas_call(
        kern,
        out_shape=jax.ShapeDtypeStruct((B, C, HW), x.dtype),
        grid=(B,),
        in_specs=[
            pl.BlockSpec((1, C, HW), lambda b: (b, 0, 0)),        # x (lane-dense)
            full((k * k, HW)),                                    # conv border masks
            full((mid, C)),                                       # w1
            full((mid, 1)),                                       # b1
            full((C, mid)),                                       # w2
            full((C, 1)),                                         # b2
            pl.BlockSpec(memory_space=pltpu.MemorySpace.SMEM),    # conv weights (flat)
            pl.BlockSpec(memory_space=pltpu.MemorySpace.SMEM),    # conv bias
        ],
        out_specs=pl.BlockSpec((1, C, HW), lambda b: (b, 0, 0)),
        compiler_params=pltpu.CompilerParams(
            dimension_semantics=("parallel",)),                   # independent batch steps
        cost_estimate=cost,
    )(x_flat, mask, w1, b1, w2, b2, conv_w, conv_b)

    return out_flat.reshape(B, C, H, W)


def cbam_reference(x, params, *, kernel_size):
    """Pure-JAX reference mirroring the PyTorch CBAM forward."""
    w1, b1, w2, b2, conv_w, conv_b = params
    B, C, H, W = x.shape
    k = kernel_size
    p = (k - 1) // 2

    avg = jnp.mean(x, axis=(2, 3))   # (B, C)
    mx = jnp.max(x, axis=(2, 3))     # (B, C)

    def bneck(v):  # (B, C)
        h = jnp.maximum(v @ w1.T + b1[:, 0], 0.0)
        return h @ w2.T + b2[:, 0]

    chan = jax.nn.sigmoid(bneck(avg) + bneck(mx))                 # (B, C)
    fp = x * chan[:, :, None, None]

    pool = jnp.stack([jnp.max(fp, axis=1), jnp.mean(fp, axis=1)], axis=1)  # (B,2,H,W)
    w = conv_w.reshape(1, 2, k, k)
    conv = jax.lax.conv_general_dilated(
        pool, w, window_strides=(1, 1), padding=((p, p), (p, p)),
        dimension_numbers=("NCHW", "OIHW", "NCHW")) + conv_b[0]   # (B,1,H,W)
    att = jax.nn.sigmoid(conv)
    return fp * att


if __name__ == "__main__":
    # Module config: n_channels_in=4, reduction_ratio=2, kernel_size=3
    B, C, H, W = 2, 4, 16, 16
    reduction_ratio = 2
    kernel_size = 3
    mid = int(C / float(reduction_ratio))

    key = jax.random.PRNGKey(0)
    k1, k2, k3, k4, k5, k6, kx = jax.random.split(key, 7)

    # Deterministic synthetic parameters (shapes follow the nn.Module __init__).
    w1 = jax.random.normal(k1, (mid, C), jnp.float32) * 0.5        # Linear(C -> mid).weight
    b1 = jax.random.normal(k2, (mid, 1), jnp.float32) * 0.1        # Linear(C -> mid).bias
    w2 = jax.random.normal(k3, (C, mid), jnp.float32) * 0.5        # Linear(mid -> C).weight
    b2 = jax.random.normal(k4, (C, 1), jnp.float32) * 0.1          # Linear(mid -> C).bias
    conv_w = jax.random.normal(k5, (2 * kernel_size * kernel_size,), jnp.float32) * 0.3
    conv_b = jax.random.normal(k6, (1,), jnp.float32) * 0.1
    params = (w1, b1, w2, b2, conv_w, conv_b)

    x = jax.random.normal(kx, (B, C, H, W), jnp.float32)

    out = jax.block_until_ready(cbam_pallas(x, params, kernel_size=kernel_size))
    ref = jax.block_until_ready(cbam_reference(x, params, kernel_size=kernel_size))

    assert out.shape == (B, C, H, W)
    assert jnp.allclose(out, ref, rtol=1e-5, atol=1e-5), (
        f"max abs err = {jnp.max(jnp.abs(out - ref))}")

    print("KERNEL_OK")
</pallas_src>

<mosaic_0001>
module attributes {stable_mosaic.version = 11 : i64} {
  func.func @_cbam_kernel(%arg0: i32, %arg1: memref<1x4x256xf32, #tpu.memory_space<vmem>>, %arg2: memref<9x256xf32, #tpu.memory_space<vmem>>, %arg3: memref<2x4xf32, #tpu.memory_space<vmem>>, %arg4: memref<2x1xf32, #tpu.memory_space<vmem>>, %arg5: memref<4x2xf32, #tpu.memory_space<vmem>>, %arg6: memref<4x1xf32, #tpu.memory_space<vmem>>, %arg7: memref<18xf32, #tpu.memory_space<smem>>, %arg8: memref<1xf32, #tpu.memory_space<smem>>, %arg9: memref<1x4x256xf32, #tpu.memory_space<vmem>>) attributes {dimension_semantics = [#tpu.dimension_semantics<parallel>], iteration_bounds = array<i64: 2>, scalar_prefetch = 0 : i64, scratch_operands = 0 : i64, tpu.core_type = #tpu.core_type<tc>, window_params = [{transform_indices = @transform_0, window_bounds = array<i64: 1, 4, 256>}, {pipeline_mode = #tpu.pipeline_mode<synchronous>, transform_indices = @transform_1, window_bounds = array<i64: 9, 256>}, {pipeline_mode = #tpu.pipeline_mode<synchronous>, transform_indices = @transform_2, window_bounds = array<i64: 2, 4>}, {pipeline_mode = #tpu.pipeline_mode<synchronous>, transform_indices = @transform_3, window_bounds = array<i64: 2, 1>}, {pipeline_mode = #tpu.pipeline_mode<synchronous>, transform_indices = @transform_4, window_bounds = array<i64: 4, 2>}, {pipeline_mode = #tpu.pipeline_mode<synchronous>, transform_indices = @transform_5, window_bounds = array<i64: 4, 1>}, {transform_indices = @transform_6, window_bounds = array<i64: 18>}, {transform_indices = @transform_7, window_bounds = array<i64: 1>}, {transform_indices = @transform_8, window_bounds = array<i64: 1, 4, 256>}]} {
    %c0 = arith.constant 0 : index
    %c0_0 = arith.constant 0 : index
    %c0_1 = arith.constant 0 : index
    %0 = vector.load %arg1[%c0, %c0_0, %c0_1] : memref<1x4x256xf32, #tpu.memory_space<vmem>>, vector<1x4x256xf32>
    %1 = vector.shape_cast %0 : vector<1x4x256xf32> to vector<4x256xf32>
    %cst = arith.constant dense<0.000000e+00> : vector<4xf32>
    %2 = vector.multi_reduction <add>, %1, %cst [1] : vector<4x256xf32> to vector<4xf32>
    %3 = vector.shape_cast %2 : vector<4xf32> to vector<4x1xf32>
    %cst_2 = arith.constant 2.560000e+02 : f32
    %4 = vector.broadcast %cst_2 : f32 to vector<4x1xf32>
    %5 = arith.divf %3, %4 : vector<4x1xf32>
    %cst_3 = arith.constant dense<0xFF800000> : vector<4xf32>
    %6 = vector.multi_reduction <maximumf>, %1, %cst_3 [1] : vector<4x256xf32> to vector<4xf32>
    %7 = vector.shape_cast %6 : vector<4xf32> to vector<4x1xf32>
    %8 = tpu.iota {dimensions = array<i32: 1>} : vector<4x2xi32>
    %c0_i32 = arith.constant 0 : i32
    %9 = vector.broadcast %c0_i32 : i32 to vector<4x2xi32>
    %10 = arith.cmpi eq, %8, %9 : vector<4x2xi32>
    %11 = vector.shape_cast %5 : vector<4x1xf32> to vector<4x1xf32>
    %12 = vector.broadcast %11 : vector<4x1xf32> to vector<4x2xf32>
    %13 = vector.shape_cast %7 : vector<4x1xf32> to vector<4x1xf32>
    %14 = vector.broadcast %13 : vector<4x1xf32> to vector<4x2xf32>
    %15 = arith.select %10, %12, %14 : vector<4x2xi1>, vector<4x2xf32>
    %c0_4 = arith.constant 0 : index
    %c0_5 = arith.constant 0 : index
    %16 = vector.load %arg3[%c0_4, %c0_5] : memref<2x4xf32, #tpu.memory_space<vmem>>, vector<2x4xf32>
    %cst_6 = arith.constant dense<0.000000e+00> : vector<2x2xf32>
    %17 = tpu.matmul %16, %15, %cst_6 {dimension_numbers = #tpu.dot_dimension_numbers<[1], [0], [0], [1], [0, 0, 1, 1], [], []>} : vector<2x4xf32>, vector<4x2xf32>, vector<2x2xf32> -> vector<2x2xf32>
    %c0_7 = arith.constant 0 : index
    %c0_8 = arith.constant 0 : index
    %18 = vector.load %arg4[%c0_7, %c0_8] : memref<2x1xf32, #tpu.memory_space<vmem>>, vector<2x1xf32>
    %19 = vector.broadcast %18 : vector<2x1xf32> to vector<2x2xf32>
    %20 = arith.addf %17, %19 : vector<2x2xf32>
    %cst_9 = arith.constant 0.000000e+00 : f32
    %21 = vector.broadcast %cst_9 : f32 to vector<2x2xf32>
    %22 = arith.maximumf %20, %21 : vector<2x2xf32>
    %c0_10 = arith.constant 0 : index
    %c0_11 = arith.constant 0 : index
    %23 = vector.load %arg5[%c0_10, %c0_11] : memref<4x2xf32, #tpu.memory_space<vmem>>, vector<4x2xf32>
    %cst_12 = arith.constant dense<0.000000e+00> : vector<4x2xf32>
    %24 = tpu.matmul %23, %22, %cst_12 {dimension_numbers = #tpu.dot_dimension_numbers<[1], [0], [0], [1], [0, 0, 1, 1], [], []>} : vector<4x2xf32>, vector<2x2xf32>, vector<4x2xf32> -> vector<4x2xf32>
    %c0_13 = arith.constant 0 : index
    %c0_14 = arith.constant 0 : index
    %25 = vector.load %arg6[%c0_13, %c0_14] : memref<4x1xf32, #tpu.memory_space<vmem>>, vector<4x1xf32>
    %26 = vector.broadcast %25 : vector<4x1xf32> to vector<4x2xf32>
    %27 = arith.addf %24, %26 : vector<4x2xf32>
    %cst_15 = arith.constant dense<0.000000e+00> : vector<4xf32>
    %28 = vector.multi_reduction <add>, %27, %cst_15 [1] : vector<4x2xf32> to vector<4xf32>
    %29 = vector.shape_cast %28 : vector<4xf32> to vector<4x1xf32>
    %30 = arith.negf %29 : vector<4x1xf32>
    %31 = math.exp %30 : vector<4x1xf32>
    %cst_16 = arith.constant 1.000000e+00 : f32
    %32 = vector.broadcast %cst_16 : f32 to vector<4x1xf32>
    %33 = arith.addf %32, %31 : vector<4x1xf32>
    %34 = arith.divf %32, %33 : vector<4x1xf32>
    %35 = vector.broadcast %34 : vector<4x1xf32> to vector<4x256xf32>
    %36 = arith.mulf %1, %35 : vector<4x256xf32>
    %cst_17 = arith.constant dense<0xFF800000> : vector<256xf32>
    %37 = vector.multi_reduction <maximumf>, %36, %cst_17 [0] : vector<4x256xf32> to vector<256xf32>
    %38 = vector.shape_cast %37 : vector<256xf32> to vector<1x256xf32>
    %cst_18 = arith.constant dense<0.000000e+00> : vector<256xf32>
    %39 = vector.multi_reduction <add>, %36, %cst_18 [0] : vector<4x256xf32> to vector<256xf32>
    %40 = vector.shape_cast %39 : vector<256xf32> to vector<1x256xf32>
    %cst_19 = arith.constant 4.000000e+00 : f32
    %41 = vector.broadcast %cst_19 : f32 to vector<1x256xf32>
    %42 = arith.divf %40, %41 : vector<1x256xf32>
    %cst_20 = arith.constant 0.000000e+00 : f32
    %43 = vector.broadcast %cst_20 : f32 to vector<1x256xf32>
    %c0_21 = arith.constant 0 : index
    %44 = memref.load %arg8[%c0_21] : memref<1xf32, #tpu.memory_space<smem>>
    %45 = vector.broadcast %44 : f32 to vector<1x256xf32>
    %46 = arith.addf %43, %45 : vector<1x256xf32>
    %c0_22 = arith.constant 0 : index
    %47 = memref.load %arg7[%c0_22] : memref<18xf32, #tpu.memory_space<smem>>
    %c9 = arith.constant 9 : index
    %48 = memref.load %arg7[%c9] : memref<18xf32, #tpu.memory_space<smem>>
    %c17_i32 = arith.constant 17 : i32
    %49 = tpu.dynamic_rotate %38 by %c17_i32 dim 1 : vector<1x256xf32>, i32 -> vector<1x256xf32>
    %c17_i32_23 = arith.constant 17 : i32
    %50 = tpu.dynamic_rotate %42 by %c17_i32_23 dim 1 : vector<1x256xf32>, i32 -> vector<1x256xf32>
    %51 = vector.broadcast %47 : f32 to vector<1x256xf32>
    %52 = arith.mulf %51, %49 : vector<1x256xf32>
    %53 = vector.broadcast %48 : f32 to vector<1x256xf32>
    %54 = arith.mulf %53, %50 : vector<1x256xf32>
    %55 = arith.addf %52, %54 : vector<1x256xf32>
    %c0_24 = arith.constant 0 : index
    %c0_25 = arith.constant 0 : index
    %56 = vector.load %arg2[%c0_24, %c0_25] : memref<9x256xf32, #tpu.memory_space<vmem>>, vector<1x256xf32>
    %cst_26 = arith.constant 0.000000e+00 : f32
    %57 = vector.broadcast %cst_26 : f32 to vector<1x256xf32>
    %58 = arith.cmpf one, %56, %57 : vector<1x256xf32>
    %cst_27 = arith.constant 0.000000e+00 : f32
    %59 = vector.broadcast %cst_27 : f32 to vector<1x256xf32>
    %60 = arith.select %58, %55, %59 : vector<1x256xi1>, vector<1x256xf32>
    %61 = arith.addf %46, %60 : vector<1x256xf32>
    %c1 = arith.constant 1 : index
    %62 = memref.load %arg7[%c1] : memref<18xf32, #tpu.memory_space<smem>>
    %c10 = arith.constant 10 : index
    %63 = memref.load %arg7[%c10] : memref<18xf32, #tpu.memory_space<smem>>
    %c16_i32 = arith.constant 16 : i32
    %64 = tpu.dynamic_rotate %38 by %c16_i32 dim 1 : vector<1x256xf32>, i32 -> vector<1x256xf32>
    %c16_i32_28 = arith.constant 16 : i32
    %65 = tpu.dynamic_rotate %42 by %c16_i32_28 dim 1 : vector<1x256xf32>, i32 -> vector<1x256xf32>
    %66 = vector.broadcast %62 : f32 to vector<1x256xf32>
    %67 = arith.mulf %66, %64 : vector<1x256xf32>
    %68 = vector.broadcast %63 : f32 to vector<1x256xf32>
    %69 = arith.mulf %68, %65 : vector<1x256xf32>
    %70 = arith.addf %67, %69 : vector<1x256xf32>
    %c1_29 = arith.constant 1 : index
    %c0_30 = arith.constant 0 : index
    %71 = vector.load %arg2[%c1_29, %c0_30] : memref<9x256xf32, #tpu.memory_space<vmem>>, vector<1x256xf32>
    %cst_31 = arith.constant 0.000000e+00 : f32
    %72 = vector.broadcast %cst_31 : f32 to vector<1x256xf32>
    %73 = arith.cmpf one, %71, %72 : vector<1x256xf32>
    %cst_32 = arith.constant 0.000000e+00 : f32
    %74 = vector.broadcast %cst_32 : f32 to vector<1x256xf32>
    %75 = arith.select %73, %70, %74 : vector<1x256xi1>, vector<1x256xf32>
    %76 = arith.addf %61, %75 : vector<1x256xf32>
    %c2 = arith.constant 2 : index
    %77 = memref.load %arg7[%c2] : memref<18xf32, #tpu.memory_space<smem>>
    %c11 = arith.constant 11 : index
    %78 = memref.load %arg7[%c11] : memref<18xf32, #tpu.memory_space<smem>>
    %c15_i32 = arith.constant 15 : i32
    %79 = tpu.dynamic_rotate %38 by %c15_i32 dim 1 : vector<1x256xf32>, i32 -> vector<1x256xf32>
    %c15_i32_33 = arith.constant 15 : i32
    %80 = tpu.dynamic_rotate %42 by %c15_i32_33 dim 1 : vector<1x256xf32>, i32 -> vector<1x256xf32>
    %81 = vector.broadcast %77 : f32 to vector<1x256xf32>
    %82 = arith.mulf %81, %79 : vector<1x256xf32>
    %83 = vector.broadcast %78 : f32 to vector<1x256xf32>
    %84 = arith.mulf %83, %80 : vector<1x256xf32>
    %85 = arith.addf %82, %84 : vector<1x256xf32>
    %c2_34 = arith.constant 2 : index
    %c0_35 = arith.constant 0 : index
    %86 = vector.load %arg2[%c2_34, %c0_35] : memref<9x256xf32, #tpu.memory_space<vmem>>, vector<1x256xf32>
    %cst_36 = arith.constant 0.000000e+00 : f32
    %87 = vector.broadcast %cst_36 : f32 to vector<1x256xf32>
    %88 = arith.cmpf one, %86, %87 : vector<1x256xf32>
    %cst_37 = arith.constant 0.000000e+00 : f32
    %89 = vector.broadcast %cst_37 : f32 to vector<1x256xf32>
    %90 = arith.select %88, %85, %89 : vector<1x256xi1>, vector<1x256xf32>
    %91 = arith.addf %76, %90 : vector<1x256xf32>
    %c3 = arith.constant 3 : index
    %92 = memref.load %arg7[%c3] : memref<18xf32, #tpu.memory_space<smem>>
    %c12 = arith.constant 12 : index
    %93 = memref.load %arg7[%c12] : memref<18xf32, #tpu.memory_space<smem>>
    %c1_i32 = arith.constant 1 : i32
    %94 = tpu.dynamic_rotate %38 by %c1_i32 dim 1 : vector<1x256xf32>, i32 -> vector<1x256xf32>
    %c1_i32_38 = arith.constant 1 : i32
    %95 = tpu.dynamic_rotate %42 by %c1_i32_38 dim 1 : vector<1x256xf32>, i32 -> vector<1x256xf32>
    %96 = vector.broadcast %92 : f32 to vector<1x256xf32>
    %97 = arith.mulf %96, %94 : vector<1x256xf32>
    %98 = vector.broadcast %93 : f32 to vector<1x256xf32>
    %99 = arith.mulf %98, %95 : vector<1x256xf32>
    %100 = arith.addf %97, %99 : vector<1x256xf32>
    %c3_39 = arith.constant 3 : index
    %c0_40 = arith.constant 0 : index
    %101 = vector.load %arg2[%c3_39, %c0_40] : memref<9x256xf32, #tpu.memory_space<vmem>>, vector<1x256xf32>
    %cst_41 = arith.constant 0.000000e+00 : f32
    %102 = vector.broadcast %cst_41 : f32 to vector<1x256xf32>
    %103 = arith.cmpf one, %101, %102 : vector<1x256xf32>
    %cst_42 = arith.constant 0.000000e+00 : f32
    %104 = vector.broadcast %cst_42 : f32 to vector<1x256xf32>
    %105 = arith.select %103, %100, %104 : vector<1x256xi1>, vector<1x256xf32>
    %106 = arith.addf %91, %105 : vector<1x256xf32>
    %c4 = arith.constant 4 : index
    %107 = memref.load %arg7[%c4] : memref<18xf32, #tpu.memory_space<smem>>
    %c13 = arith.constant 13 : index
    %108 = memref.load %arg7[%c13] : memref<18xf32, #tpu.memory_space<smem>>
    %109 = vector.broadcast %107 : f32 to vector<1x256xf32>
    %110 = arith.mulf %109, %38 : vector<1x256xf32>
    %111 = arith.addf %106, %110 : vector<1x256xf32>
    %112 = vector.broadcast %108 : f32 to vector<1x256xf32>
    %113 = arith.mulf %112, %42 : vector<1x256xf32>
    %114 = arith.addf %111, %113 : vector<1x256xf32>
    %c5 = arith.constant 5 : index
    %115 = memref.load %arg7[%c5] : memref<18xf32, #tpu.memory_space<smem>>
    %c14 = arith.constant 14 : index
    %116 = memref.load %arg7[%c14] : memref<18xf32, #tpu.memory_space<smem>>
    %c255_i32 = arith.constant 255 : i32
    %117 = tpu.dynamic_rotate %38 by %c255_i32 dim 1 : vector<1x256xf32>, i32 -> vector<1x256xf32>
    %c255_i32_43 = arith.constant 255 : i32
    %118 = tpu.dynamic_rotate %42 by %c255_i32_43 dim 1 : vector<1x256xf32>, i32 -> vector<1x256xf32>
    %119 = vector.broadcast %115 : f32 to vector<1x256xf32>
    %120 = arith.mulf %119, %117 : vector<1x256xf32>
    %121 = vector.broadcast %116 : f32 to vector<1x256xf32>
    %122 = arith.mulf %121, %118 : vector<1x256xf32>
    %123 = arith.addf %120, %122 : vector<1x256xf32>
    %c5_44 = arith.constant 5 : index
    %c0_45 = arith.constant 0 : index
    %124 = vector.load %arg2[%c5_44, %c0_45] : memref<9x256xf32, #tpu.memory_space<vmem>>, vector<1x256xf32>
    %cst_46 = arith.constant 0.000000e+00 : f32
    %125 = vector.broadcast %cst_46 : f32 to vector<1x256xf32>
    %126 = arith.cmpf one, %124, %125 : vector<1x256xf32>
    %cst_47 = arith.constant 0.000000e+00 : f32
    %127 = vector.broadcast %cst_47 : f32 to vector<1x256xf32>
    %128 = arith.select %126, %123, %127 : vector<1x256xi1>, vector<1x256xf32>
    %129 = arith.addf %114, %128 : vector<1x256xf32>
    %c6 = arith.constant 6 : index
    %130 = memref.load %arg7[%c6] : memref<18xf32, #tpu.memory_space<smem>>
    %c15 = arith.constant 15 : index
    %131 = memref.load %arg7[%c15] : memref<18xf32, #tpu.memory_space<smem>>
    %c241_i32 = arith.constant 241 : i32
    %132 = tpu.dynamic_rotate %38 by %c241_i32 dim 1 : vector<1x256xf32>, i32 -> vector<1x256xf32>
    %c241_i32_48 = arith.constant 241 : i32
    %133 = tpu.dynamic_rotate %42 by %c241_i32_48 dim 1 : vector<1x256xf32>, i32 -> vector<1x256xf32>
    %134 = vector.broadcast %130 : f32 to vector<1x256xf32>
    %135 = arith.mulf %134, %132 : vector<1x256xf32>
    %136 = vector.broadcast %131 : f32 to vector<1x256xf32>
    %137 = arith.mulf %136, %133 : vector<1x256xf32>
    %138 = arith.addf %135, %137 : vector<1x256xf32>
    %c6_49 = arith.constant 6 : index
    %c0_50 = arith.constant 0 : index
    %139 = vector.load %arg2[%c6_49, %c0_50] : memref<9x256xf32, #tpu.memory_space<vmem>>, vector<1x256xf32>
    %cst_51 = arith.constant 0.000000e+00 : f32
    %140 = vector.broadcast %cst_51 : f32 to vector<1x256xf32>
    %141 = arith.cmpf one, %139, %140 : vector<1x256xf32>
    %cst_52 = arith.constant 0.000000e+00 : f32
    %142 = vector.broadcast %cst_52 : f32 to vector<1x256xf32>
    %143 = arith.select %141, %138, %142 : vector<1x256xi1>, vector<1x256xf32>
    %144 = arith.addf %129, %143 : vector<1x256xf32>
    %c7 = arith.constant 7 : index
    %145 = memref.load %arg7[%c7] : memref<18xf32, #tpu.memory_space<smem>>
    %c16 = arith.constant 16 : index
    %146 = memref.load %arg7[%c16] : memref<18xf32, #tpu.memory_space<smem>>
    %c240_i32 = arith.constant 240 : i32
    %147 = tpu.dynamic_rotate %38 by %c240_i32 dim 1 : vector<1x256xf32>, i32 -> vector<1x256xf32>
    %c240_i32_53 = arith.constant 240 : i32
    %148 = tpu.dynamic_rotate %42 by %c240_i32_53 dim 1 : vector<1x256xf32>, i32 -> vector<1x256xf32>
    %149 = vector.broadcast %145 : f32 to vector<1x256xf32>
    %150 = arith.mulf %149, %147 : vector<1x256xf32>
    %151 = vector.broadcast %146 : f32 to vector<1x256xf32>
    %152 = arith.mulf %151, %148 : vector<1x256xf32>
    %153 = arith.addf %150, %152 : vector<1x256xf32>
    %c7_54 = arith.constant 7 : index
    %c0_55 = arith.constant 0 : index
    %154 = vector.load %arg2[%c7_54, %c0_55] : memref<9x256xf32, #tpu.memory_space<vmem>>, vector<1x256xf32>
    %cst_56 = arith.constant 0.000000e+00 : f32
    %155 = vector.broadcast %cst_56 : f32 to vector<1x256xf32>
    %156 = arith.cmpf one, %154, %155 : vector<1x256xf32>
    %cst_57 = arith.constant 0.000000e+00 : f32
    %157 = vector.broadcast %cst_57 : f32 to vector<1x256xf32>
    %158 = arith.select %156, %153, %157 : vector<1x256xi1>, vector<1x256xf32>
    %159 = arith.addf %144, %158 : vector<1x256xf32>
    %c8 = arith.constant 8 : index
    %160 = memref.load %arg7[%c8] : memref<18xf32, #tpu.memory_space<smem>>
    %c17 = arith.constant 17 : index
    %161 = memref.load %arg7[%c17] : memref<18xf32, #tpu.memory_space<smem>>
    %c239_i32 = arith.constant 239 : i32
    %162 = tpu.dynamic_rotate %38 by %c239_i32 dim 1 : vector<1x256xf32>, i32 -> vector<1x256xf32>
    %c239_i32_58 = arith.constant 239 : i32
    %163 = tpu.dynamic_rotate %42 by %c239_i32_58 dim 1 : vector<1x256xf32>, i32 -> vector<1x256xf32>
    %164 = vector.broadcast %160 : f32 to vector<1x256xf32>
    %165 = arith.mulf %164, %162 : vector<1x256xf32>
    %166 = vector.broadcast %161 : f32 to vector<1x256xf32>
    %167 = arith.mulf %166, %163 : vector<1x256xf32>
    %168 = arith.addf %165, %167 : vector<1x256xf32>
    %c8_59 = arith.constant 8 : index
    %c0_60 = arith.constant 0 : index
    %169 = vector.load %arg2[%c8_59, %c0_60] : memref<9x256xf32, #tpu.memory_space<vmem>>, vector<1x256xf32>
    %cst_61 = arith.constant 0.000000e+00 : f32
    %170 = vector.broadcast %cst_61 : f32 to vector<1x256xf32>
    %171 = arith.cmpf one, %169, %170 : vector<1x256xf32>
    %cst_62 = arith.constant 0.000000e+00 : f32
    %172 = vector.broadcast %cst_62 : f32 to vector<1x256xf32>
    %173 = arith.select %171, %168, %172 : vector<1x256xi1>, vector<1x256xf32>
    %174 = arith.addf %159, %173 : vector<1x256xf32>
    %175 = arith.negf %174 : vector<1x256xf32>
    %176 = math.exp %175 : vector<1x256xf32>
    %cst_63 = arith.constant 1.000000e+00 : f32
    %177 = vector.broadcast %cst_63 : f32 to vector<1x256xf32>
    %178 = arith.addf %177, %176 : vector<1x256xf32>
    %179 = arith.divf %177, %178 : vector<1x256xf32>
    %180 = vector.broadcast %179 : vector<1x256xf32> to vector<4x256xf32>
    %181 = arith.mulf %36, %180 : vector<4x256xf32>
    %c0_64 = arith.constant 0 : index
    %c0_65 = arith.constant 0 : index
    %c0_66 = arith.constant 0 : index
    %182 = vector.load %arg9[%c0_64, %c0_65, %c0_66] : memref<1x4x256xf32, #tpu.memory_space<vmem>>, vector<1x4x256xf32>
    %183 = vector.shape_cast %182 : vector<1x4x256xf32> to vector<4x256xf32>
    %184 = vector.shape_cast %181 : vector<4x256xf32> to vector<1x4x256xf32>
    tpu.vector_store %arg9[%c0_64, %c0_65, %c0_66], %184 {strides = array<i32>} : memref<1x4x256xf32, #tpu.memory_space<vmem>>, vector<1x4x256xf32>,
    return
  }
  func.func @transform_0(%arg0: i32) -> (i32, i32, i32) {
    %c0_i32 = arith.constant 0 : i32
    %c0_i32_0 = arith.constant 0 : i32
    %c0_i32_1 = arith.constant 0 : i32
    return %arg0, %c0_i32, %c0_i32_0 : i32, i32, i32
  }
  func.func @transform_1(%arg0: i32) -> (i32, i32) {
    %c0_i32 = arith.constant 0 : i32
    %c0_i32_0 = arith.constant 0 : i32
    %c0_i32_1 = arith.constant 0 : i32
    return %c0_i32, %c0_i32_0 : i32, i32
  }
  func.func @transform_2(%arg0: i32) -> (i32, i32) {
    %c0_i32 = arith.constant 0 : i32
    %c0_i32_0 = arith.constant 0 : i32
    %c0_i32_1 = arith.constant 0 : i32
    return %c0_i32, %c0_i32_0 : i32, i32
  }
  func.func @transform_3(%arg0: i32) -> (i32, i32) {
    %c0_i32 = arith.constant 0 : i32
    %c0_i32_0 = arith.constant 0 : i32
    %c0_i32_1 = arith.constant 0 : i32
    return %c0_i32, %c0_i32_0 : i32, i32
  }
  func.func @transform_4(%arg0: i32) -> (i32, i32) {
    %c0_i32 = arith.constant 0 : i32
    %c0_i32_0 = arith.constant 0 : i32
    %c0_i32_1 = arith.constant 0 : i32
    return %c0_i32, %c0_i32_0 : i32, i32
  }
  func.func @transform_5(%arg0: i32) -> (i32, i32) {
    %c0_i32 = arith.constant 0 : i32
    %c0_i32_0 = arith.constant 0 : i32
    %c0_i32_1 = arith.constant 0 : i32
    return %c0_i32, %c0_i32_0 : i32, i32
  }
  func.func @transform_6(%arg0: i32) -> i32 {
    %c0_i32 = arith.constant 0 : i32
    %c0_i32_0 = arith.constant 0 : i32
    return %c0_i32 : i32
  }
  func.func @transform_7(%arg0: i32) -> i32 {
    %c0_i32 = arith.constant 0 : i32
    %c0_i32_0 = arith.constant 0 : i32
    return %c0_i32 : i32
  }
  func.func @transform_8(%arg0: i32) -> (i32, i32, i32) {
    %c0_i32 = arith.constant 0 : i32
    %c0_i32_0 = arith.constant 0 : i32
    %c0_i32_1 = arith.constant 0 : i32
    return %arg0, %c0_i32, %c0_i32_0 : i32, i32, i32
  }
}

</mosaic_0001>

<llo_original>
// kernel: tpu_custom_call.1
$region0: #{tpu_custom_call.1}
  #allocation0 [shape = 'u32[]', space=smem, size = 0x4, offset = 0x4, fixed_abs, tag = 'smem constant byte address 0x4 - core index']
  #allocation1 [shape = 'u32[72,128]{1,0:T(1,128)}', space=vmem, size = 0x9000, scoped, tag = 'internal scratch']
  #allocation2 [shape = 'f32[1]{0:T(128)S(6)}', space=smem, size = 0x200, scoped, tag = 'scoped memory for tpu_custom_call.1']
  %s0 = inlined_call_operand.hbm [shape: f32[2,4,256], index: 0, kind: input, shape index: {}]
  %s1 = inlined_call_operand.hbm [shape: f32[9,256], index: 1, kind: input, shape index: {}]
  %s2 = inlined_call_operand.vmem [shape: f32[2,4], index: 2, kind: input, shape index: {}]
  %s3 = inlined_call_operand.vmem [shape: f32[2,1], index: 3, kind: input, shape index: {}]
  %s4 = inlined_call_operand.vmem [shape: f32[4,2], index: 4, kind: input, shape index: {}]
  %s5 = inlined_call_operand.vmem [shape: f32[4,1], index: 5, kind: input, shape index: {}]
  %s6 = inlined_call_operand.vmem [shape: f32[18], index: 6, kind: input, shape index: {}]
  %s7 = inlined_call_operand.<no memory space> [shape: f32[1], index: 7, kind: input, shape index: {}]
  %s8 = inlined_call_operand.hbm [shape: f32[2,4,256], index: 8, kind: output, shape index: {}]
  %s9 = sld [smem:[#allocation0]]
  $region77: #{tpu_custom_call.1} parent=0
    _
  %s11 = ssub.s32 1, %s9
  %s12 = scalar_select 0, %s11, %s9
  %13 = sst [smem:[#allocation2]] %s7
  $region1: #{tpu_custom_call.1} parent=0
    #allocation3 [shape = 'u8[8192]{0}', space=vmem, size = 0x2000, scoped, tag = 'input window, operand 0']
    #allocation4 [shape = 's32[2]{0}', space=sflag, size = 0x8, scoped, tag = 'scoped memory for tpu_custom_call.1']
    #allocation5 [shape = 's32[2]{0}', space=sflag, size = 0x8, scoped, tag = 'scoped memory for tpu_custom_call.1']
    #allocation6 [shape = 's32[2]{0}', space=sflag, size = 0x8, scoped, tag = 'scoped memory for tpu_custom_call.1']
    #allocation7 [shape = 'u8[16384]{0}', space=vmem, size = 0x4000, scoped, tag = 'input window, operand 1, single buffered']
    #allocation8 [shape = 's32[1]{0}', space=sflag, size = 0x4, scoped, tag = 'scoped memory for tpu_custom_call.1']
    #allocation9 [shape = 'u8[512]{0}', space=smem, size = 0x200, scoped, tag = 'input window, operand 6, single buffered']
    #allocation10 [shape = 'u8[8192]{0}', space=vmem, size = 0x2000, scoped, tag = 'output window, operand 0']
    %14 = vsyncpa [#allocation4], 0
    %s15 = scalar_lea.sflag [#allocation4], 1
    %16 = vsyncpa %s15, 0
    %17 = vsyncpa [#allocation8], 0
    %18 = vsyncpa [#allocation6], 0
    %19 = vsyncpa [#allocation5], 0
    %s20 = scalar_lea.sflag [#allocation5], 1
    %21 = vsyncpa %s20, 0
    loop: start=0, step=1, limit=4
    $region2: #{tpu_custom_call.1} parent=1 // loop_pre_header
      _
    $region3: #{tpu_custom_call.1} parent=1 // loop_header
      %s23 = sphi 0, %s27
      %p24 = scmp.ge.s32.totalorder %s23, 4
      %s33 = sphi 0, %s35
      %s36 = sphi 0, %s33
      %s37 = sphi 0, %s36
      %s53 = sphi 0, %s37
      %s57 = sphi 0, %s57
      %s59 = sphi 0, %s57
      %s60 = sphi 0, %s59
      %s74 = sphi 0, %s60
      %s78 = sphi 0, %s78
      %s80 = sphi 0, %s78
      %s81 = sphi 0, %s80
      %s95 = sphi 0, %s81
      %s99 = sphi 0, %s99
      %s101 = sphi 0, %s99
      %s102 = sphi 0, %s101
      %s116 = sphi 0, %s102
      %s120 = sphi 0, %s120
      %s122 = sphi 0, %s120
      %s123 = sphi 0, %s122
      %s137 = sphi 0, %s123
      %s141 = sphi 0, %s141
      %s143 = sphi 0, %s141
      %s144 = sphi 0, %s143
      %s158 = sphi 0, %s144
      %s162 = sphi 0, %s162
      %s164 = sphi 0, %s162
      %s165 = sphi 0, %s164
      %s179 = sphi 0, %s165
      %s183 = sphi 0, %s183
      %s185 = sphi 0, %s183
      %s186 = sphi 0, %s185
      %s200 = sphi 0, %s186
      %s206 = sphi 0, %s208
      %s209 = sphi 0, %s206
      %s210 = sphi 0, %s209
      %s226 = sphi 0, %s210
    $region4: #{tpu_custom_call.1} parent=1 // loop_header_branch
      %26 = sbr.rel (%p24) target = $region8
    $region5: #{tpu_custom_call.1} parent=1 // loop_body
      %s28 = ssub.s32 %s23, 1
      %s29 = ssub.s32 %s23, 2
      %s30 = sadd.s32 %s23, 1
      %s31 = ssub.s32 %s23, %s30
      %p32 = scmp.eq.s32.totalorder %s31, 0
      %s34 = sadd.s32 %s33, 1
      %s35 = scalar_select %p32, %s33, %s34
      %p38 = pneg %p32
      %p39 = scmp.eq.s32.totalorder %s23, 1
      %p40 = por %p38, %p39
      %p41 = scmp.ne.s32.totalorder %s33, %s36
      %p42 = scmp.eq.s32.totalorder %s23, 0
      %p43 = por %p41, %p42
      %p44 = scmp.ne.s32.totalorder %s33, %s36
      %p45 = scmp.eq.s32.totalorder %s28, 1
      %p46 = por %p44, %p45
      %p47 = scmp.ne.s32.totalorder %s36, %s37
      %p48 = scmp.eq.s32.totalorder %s28, 0
      %p49 = por %p47, %p48
      %p50 = scmp.ne.s32.totalorder %s36, %s37
      %p51 = scmp.eq.s32.totalorder %s29, 1
      %p52 = por %p50, %p51
      %p54 = scmp.ne.s32.totalorder %s37, %s53
      %p55 = scmp.eq.s32.totalorder %s29, 0
      %p56 = por %p54, %p55
      %s58 = sadd.s32 %s57, 1
      %p61 = scmp.eq.s32.totalorder %s23, 1
      %p62 = scmp.ne.s32.totalorder %s57, %s59
      %p63 = scmp.eq.s32.totalorder %s23, 0
      %p64 = por %p62, %p63
      %p65 = scmp.ne.s32.totalorder %s57, %s59
      %p66 = scmp.eq.s32.totalorder %s28, 1
      %p67 = por %p65, %p66
      %p68 = scmp.ne.s32.totalorder %s59, %s60
      %p69 = scmp.eq.s32.totalorder %s28, 0
      %p70 = por %p68, %p69
      %p71 = scmp.ne.s32.totalorder %s59, %s60
      %p72 = scmp.eq.s32.totalorder %s29, 1
      %p73 = por %p71, %p72
      %p75 = scmp.ne.s32.totalorder %s60, %s74
      %p76 = scmp.eq.s32.totalorder %s29, 0
      %p77 = por %p75, %p76
      %s79 = sadd.s32 %s78, 1
      %p82 = scmp.eq.s32.totalorder %s23, 1
      %p83 = scmp.ne.s32.totalorder %s78, %s80
      %p84 = scmp.eq.s32.totalorder %s23, 0
      %p85 = por %p83, %p84
      %p86 = scmp.ne.s32.totalorder %s78, %s80
      %p87 = scmp.eq.s32.totalorder %s28, 1
      %p88 = por %p86, %p87
      %p89 = scmp.ne.s32.totalorder %s80, %s81
      %p90 = scmp.eq.s32.totalorder %s28, 0
      %p91 = por %p89, %p90
      %p92 = scmp.ne.s32.totalorder %s80, %s81
      %p93 = scmp.eq.s32.totalorder %s29, 1
      %p94 = por %p92, %p93
      %p96 = scmp.ne.s32.totalorder %s81, %s95
      %p97 = scmp.eq.s32.totalorder %s29, 0
      %p98 = por %p96, %p97
      %s100 = sadd.s32 %s99, 1
      %p103 = scmp.eq.s32.totalorder %s23, 1
      %p104 = scmp.ne.s32.totalorder %s99, %s101
      %p105 = scmp.eq.s32.totalorder %s23, 0
      %p106 = por %p104, %p105
      %p107 = scmp.ne.s32.totalorder %s99, %s101
      %p108 = scmp.eq.s32.totalorder %s28, 1
      %p109 = por %p107, %p108
      %p110 = scmp.ne.s32.totalorder %s101, %s102
      %p111 = scmp.eq.s32.totalorder %s28, 0
      %p112 = por %p110, %p111
      %p113 = scmp.ne.s32.totalorder %s101, %s102
      %p114 = scmp.eq.s32.totalorder %s29, 1
      %p115 = por %p113, %p114
      %p117 = scmp.ne.s32.totalorder %s102, %s116
      %p118 = scmp.eq.s32.totalorder %s29, 0
      %p119 = por %p117, %p118
      %s121 = sadd.s32 %s120, 1
      %p124 = scmp.eq.s32.totalorder %s23, 1
      %p125 = scmp.ne.s32.totalorder %s120, %s122
      %p126 = scmp.eq.s32.totalorder %s23, 0
      %p127 = por %p125, %p126
      %p128 = scmp.ne.s32.totalorder %s120, %s122
      %p129 = scmp.eq.s32.totalorder %s28, 1
      %p130 = por %p128, %p129
      %p131 = scmp.ne.s32.totalorder %s122, %s123
      %p132 = scmp.eq.s32.totalorder %s28, 0
      %p133 = por %p131, %p132
      %p134 = scmp.ne.s32.totalorder %s122, %s123
      %p135 = scmp.eq.s32.totalorder %s29, 1
      %p136 = por %p134, %p135
      %p138 = scmp.ne.s32.totalorder %s123, %s137
      %p139 = scmp.eq.s32.totalorder %s29, 0
      %p140 = por %p138, %p139
      %s142 = sadd.s32 %s141, 1
      %p145 = scmp.eq.s32.totalorder %s23, 1
      %p146 = scmp.ne.s32.totalorder %s141, %s143
      %p147 = scmp.eq.s32.totalorder %s23, 0
      %p148 = por %p146, %p147
      %p149 = scmp.ne.s32.totalorder %s141, %s143
      %p150 = scmp.eq.s32.totalorder %s28, 1
      %p151 = por %p149, %p150
      %p152 = scmp.ne.s32.totalorder %s143, %s144
      %p153 = scmp.eq.s32.totalorder %s28, 0
      %p154 = por %p152, %p153
      %p155 = scmp.ne.s32.totalorder %s143, %s144
      %p156 = scmp.eq.s32.totalorder %s29, 1
      %p157 = por %p155, %p156
      %p159 = scmp.ne.s32.totalorder %s144, %s158
      %p160 = scmp.eq.s32.totalorder %s29, 0
      %p161 = por %p159, %p160
      %s163 = sadd.s32 %s162, 1
      %p166 = scmp.eq.s32.totalorder %s23, 1
      %p167 = scmp.ne.s32.totalorder %s162, %s164
      %p168 = scmp.eq.s32.totalorder %s23, 0
      %p169 = por %p167, %p168
      %p170 = scmp.ne.s32.totalorder %s162, %s164
      %p171 = scmp.eq.s32.totalorder %s28, 1
      %p172 = por %p170, %p171
      %p173 = scmp.ne.s32.totalorder %s164, %s165
      %p174 = scmp.eq.s32.totalorder %s28, 0
      %p175 = por %p173, %p174
      %p176 = scmp.ne.s32.totalorder %s164, %s165
      %p177 = scmp.eq.s32.totalorder %s29, 1
      %p178 = por %p176, %p177
      %p180 = scmp.ne.s32.totalorder %s165, %s179
      %p181 = scmp.eq.s32.totalorder %s29, 0
      %p182 = por %p180, %p181
      %s184 = sadd.s32 %s183, 1
      %p187 = scmp.eq.s32.totalorder %s23, 1
      %p188 = scmp.ne.s32.totalorder %s183, %s185
      %p189 = scmp.eq.s32.totalorder %s23, 0
      %p190 = por %p188, %p189
      %p191 = scmp.ne.s32.totalorder %s183, %s185
      %p192 = scmp.eq.s32.totalorder %s28, 1
      %p193 = por %p191, %p192
      %p194 = scmp.ne.s32.totalorder %s185, %s186
      %p195 = scmp.eq.s32.totalorder %s28, 0
      %p196 = por %p194, %p195
      %p197 = scmp.ne.s32.totalorder %s185, %s186
      %p198 = scmp.eq.s32.totalorder %s29, 1
      %p199 = por %p197, %p198
      %p201 = scmp.ne.s32.totalorder %s186, %s200
      %p202 = scmp.eq.s32.totalorder %s29, 0
      %p203 = por %p201, %p202
      %s204 = ssub.s32 %s23, %s30
      %p205 = scmp.eq.s32.totalorder %s204, 0
      %s207 = sadd.s32 %s206, 1
      %s208 = scalar_select %p205, %s206, %s207
      %p211 = pneg %p205
      %p212 = scmp.eq.s32.totalorder %s23, 1
      %p213 = por %p211, %p212
      %p214 = scmp.ne.s32.totalorder %s206, %s209
      %p215 = scmp.eq.s32.totalorder %s23, 0
      %p216 = por %p214, %p215
      %p217 = scmp.ne.s32.totalorder %s206, %s209
      %p218 = scmp.eq.s32.totalorder %s28, 1
      %p219 = por %p217, %p218
      %p220 = scmp.ne.s32.totalorder %s209, %s210
      %p221 = scmp.eq.s32.totalorder %s28, 0
      %p222 = por %p220, %p221
      %p223 = scmp.ne.s32.totalorder %s209, %s210
      %p224 = scmp.eq.s32.totalorder %s29, 1
      %p225 = por %p223, %p224
      %p227 = scmp.ne.s32.totalorder %s210, %s226
      %p228 = scmp.eq.s32.totalorder %s29, 0
      %p229 = por %p227, %p228
      %p230 = scmp.le.s32.totalorder 1, %s23
      %p231 = scmp.lt.s32.totalorder %s23, 3
      %p232 = pnand %p230, %p231
      %p233 = pneg %p232
      // Predicated region
      $region9: #{tpu_custom_call.1} parent=5 // pred_check
        _
      $region10: #{tpu_custom_call.1} parent=5 // pred_check_branch
        %235 = sbr.rel (%p232) target = $region12
      $region11: #{tpu_custom_call.1} parent=5 // pred_region
        %s236 = ssub.s32 %s23, 1
        // Predicated region
        $region13: #{tpu_custom_call.1} parent=11 // pred_check
          %p237 = pneg %p70
        $region14: #{tpu_custom_call.1} parent=11 // pred_check_branch
          %239 = sbr.rel (%p237) target = $region16
        $region15: #{tpu_custom_call.1} parent=11 // pred_region
          %241 = vsyncadd [#allocation8], 0
          %s242 = sshll.u32 %s1, 4
          %s243 = int_to_ptr.hbm [resolvable:$true] %s242
          %s244 = sshll.u32 [#allocation7], 4
          %s245 = int_to_ptr.vmem [resolvable:$true] %s244
          %250 = dma.hbm_to_vmem [thread:$0]  %s243, 512, %s245, [#allocation8], 256, 256, 16
        $region16: #{tpu_custom_call.1} parent=11 // pred_fallthru
          _
        // Predicated region
        $region17: #{tpu_custom_call.1} parent=11 // pred_check
          %p251 = pneg %p91
        $region18: #{tpu_custom_call.1} parent=11 // pred_check_branch
          %253 = sbr.rel (%p251) target = $region20
        $region19: #{tpu_custom_call.1} parent=11 // pred_region
          _
        $region20: #{tpu_custom_call.1} parent=11 // pred_fallthru
          _
        // Predicated region
        $region21: #{tpu_custom_call.1} parent=11 // pred_check
          %p254 = pneg %p112
        $region22: #{tpu_custom_call.1} parent=11 // pred_check_branch
          %256 = sbr.rel (%p254) target = $region24
        $region23: #{tpu_custom_call.1} parent=11 // pred_region
          _
        $region24: #{tpu_custom_call.1} parent=11 // pred_fallthru
          _
        // Predicated region
        $region25: #{tpu_custom_call.1} parent=11 // pred_check
          %p257 = pneg %p133
        $region26: #{tpu_custom_call.1} parent=11 // pred_check_branch
          %259 = sbr.rel (%p257) target = $region28
        $region27: #{tpu_custom_call.1} parent=11 // pred_region
          _
        $region28: #{tpu_custom_call.1} parent=11 // pred_fallthru
          _
        // Predicated region
        $region29: #{tpu_custom_call.1} parent=11 // pred_check
          %p260 = pneg %p154
        $region30: #{tpu_custom_call.1} parent=11 // pred_check_branch
          %262 = sbr.rel (%p260) target = $region32
        $region31: #{tpu_custom_call.1} parent=11 // pred_region
          _
        $region32: #{tpu_custom_call.1} parent=11 // pred_fallthru
          _
        // Predicated region
        $region33: #{tpu_custom_call.1} parent=11 // pred_check
          %p263 = pneg %p175
        $region34: #{tpu_custom_call.1} parent=11 // pred_check_branch
          %265 = sbr.rel (%p263) target = $region36
        $region35: #{tpu_custom_call.1} parent=11 // pred_region
          %267 = vsyncadd [#allocation6], 0
          %s269 = sshll.u32 %s6, 4
          %s270 = int_to_ptr.vmem [resolvable:$true] %s269
          %272 = dma.vmem_to_smem %s270, 16, [#allocation9], [#allocation6]
        $region36: #{tpu_custom_call.1} parent=11 // pred_fallthru
          _
        // Predicated region
        $region37: #{tpu_custom_call.1} parent=11 // pred_check
          %p273 = pneg %p196
        $region38: #{tpu_custom_call.1} parent=11 // pred_check_branch
          %275 = sbr.rel (%p273) target = $region40
        $region39: #{tpu_custom_call.1} parent=11 // pred_region
          _
        $region40: #{tpu_custom_call.1} parent=11 // pred_fallthru
          _
      $region12: #{tpu_custom_call.1} parent=5 // pred_fallthru
        _
      %p276 = scmp.lt.s32.totalorder %s23, 2
      // Predicated region
      $region41: #{tpu_custom_call.1} parent=5 // pred_check
        %p277 = pneg %p276
      $region42: #{tpu_custom_call.1} parent=5 // pred_check_branch
        %279 = sbr.rel (%p277) target = $region44
      $region43: #{tpu_custom_call.1} parent=5 // pred_region
        // Predicated region
        $region45: #{tpu_custom_call.1} parent=43 // pred_check
          %p280 = pneg %p43
        $region46: #{tpu_custom_call.1} parent=43 // pred_check_branch
          %282 = sbr.rel (%p280) target = $region48
        $region47: #{tpu_custom_call.1} parent=43 // pred_region
          %s283 = sand.u32 %s33, 1
          %s284 = scalar_lea.sflag [#allocation4], %s283
          %s285 = sand.u32 %s33, 1
          %s286 = smul.addr %s285, 8
          %s287 = scalar_lea.vmem [#allocation3], %s286
          %289 = vsyncadd %s284, 0
          %s290 = smul.addr %s23, 2
          %s291 = smul.addr %s290, 4
          %s292 = scalar_lea.hbm %s0, %s291
          %s294 = sshll.u32 %s292, 4
          %s295 = int_to_ptr.hbm [resolvable:$true] %s294
          %s296 = sshll.u32 %s287, 4
          %s297 = int_to_ptr.vmem [resolvable:$true] %s296
          %299 = dma.hbm_to_vmem [thread:$0]  %s295, 128, %s297, %s284
        $region48: #{tpu_custom_call.1} parent=43 // pred_fallthru
          _
      $region44: #{tpu_custom_call.1} parent=5 // pred_fallthru
        _
      %p300 = scmp.le.s32.totalorder 1, %s23
      %p301 = scmp.lt.s32.totalorder %s23, 3
      %p302 = pnand %p300, %p301
      %p303 = pneg %p302
      // Predicated region
      $region49: #{tpu_custom_call.1} parent=5 // pred_check
        _
      $region50: #{tpu_custom_call.1} parent=5 // pred_check_branch
        %305 = sbr.rel (%p302) target = $region52
      $region51: #{tpu_custom_call.1} parent=5 // pred_region
        %s306 = ssub.s32 %s23, 1
        %s307 = sand.u32 %s36, 1
        %s308 = scalar_lea.sflag [#allocation4], %s307
        %s309 = sand.u32 %s36, 1
        %s310 = smul.addr %s309, 8
        %s311 = scalar_lea.vmem [#allocation3], %s310
        // Predicated region
        $region53: #{tpu_custom_call.1} parent=51 // pred_check
          %p312 = pneg %p49
        $region54: #{tpu_custom_call.1} parent=51 // pred_check_branch
          %314 = sbr.rel (%p312) target = $region56
        $region55: #{tpu_custom_call.1} parent=51 // pred_region
          %316 = dma.done %s308, 128
        $region56: #{tpu_custom_call.1} parent=51 // pred_fallthru
          _
        // Predicated region
        $region57: #{tpu_custom_call.1} parent=51 // pred_check
          %p317 = pneg %p70
        $region58: #{tpu_custom_call.1} parent=51 // pred_check_branch
          %319 = sbr.rel (%p317) target = $region60
        $region59: #{tpu_custom_call.1} parent=51 // pred_region
          %321 = dma.done [#allocation8], 512
        $region60: #{tpu_custom_call.1} parent=51 // pred_fallthru
          _
        // Predicated region
        $region61: #{tpu_custom_call.1} parent=51 // pred_check
          %p322 = pneg %p175
        $region62: #{tpu_custom_call.1} parent=51 // pred_check_branch
          %324 = sbr.rel (%p322) target = $region64
        $region63: #{tpu_custom_call.1} parent=51 // pred_region
          %326 = dma.done [#allocation6], 16
        $region64: #{tpu_custom_call.1} parent=51 // pred_fallthru
          _
        %327 = sfence
        %s328 = sand.u32 %s36, 1
        %s329 = scalar_lea.sflag [#allocation4], %s328
        %s330 = sand.u32 %s36, 1
        %s331 = smul.addr %s330, 8
        %s332 = scalar_lea.vmem [#allocation3], %s331
        %p333 = pneg %p49
        %p334 = pneg %p46
        %p335 = pneg %p70
        %p336 = pneg %p67
        %p337 = pneg %p91
        %p338 = pneg %p88
        %p339 = pneg %p112
        %p340 = pneg %p109
        %p341 = pneg %p133
        %p342 = pneg %p130
        %p343 = pneg %p154
        %p344 = pneg %p151
        %p345 = pneg %p175
        %p346 = pneg %p172
        %p347 = pneg %p196
        %p348 = pneg %p193
        %p349 = pneg %p222
        %p350 = pneg %p219
        %s351 = sand.u32 %s209, 1
        %s352 = scalar_lea.sflag [#allocation5], %s351
        %s353 = sand.u32 %s209, 1
        %s354 = smul.addr %s353, 8
        %s355 = scalar_lea.vmem [#allocation10], %s354
        %v356 = vld [vmem:[%s311] sm:$0xff]
        %358 = vst [vmem:[#allocation1] ss:$2 sm:$0xff] %v356
        %v359 = vld.sshfl [vmem:[#allocation1] sm:$0xff pattern:$0x75316420]
        %v360 = vld.sshfl [vmem:[#allocation1 + $0x8] sm:$0xff pattern:$0x75316420]
        %vm363 = vcmask 1043456
        %v364 = vsel %vm363, %v359, 0.0
        %v365 = vsel %vm363, %v360, 0.0
        %v366 = vadd.f32 %v364, %v365
        %367 = vadd.xlane.f32.xlu0 %v366
        %v368 = vpop.xlane.xlu0 %367
        %v369 = vrcp.pop 256.0
        %v370 = vmul.f32 256.0, %v369
        %v371 = vsub.f32 1.0, %v370
        %v372 = vmul.f32 %v369, %v371
        %v373 = vadd.f32 %v369, %v372
        %vm374 = vweird.f32 %v369
        %v375 = vsel %vm374, %v369, %v373
        %v376 = vmul.f32 %v368, %v375
        %377 = vst [vmem:[#allocation1] ss:$2 sm:$0xff] %v356
        %v378 = vld.sshfl [vmem:[#allocation1] sm:$0xff pattern:$0x75316420]
        %v379 = vld.sshfl [vmem:[#allocation1 + $0x8] sm:$0xff pattern:$0x75316420]
        %v382 = vsel %vm363, %v378, -inf
        %v383 = vsel %vm363, %v379, -inf
        %v384 = vmax.f32 %v382, %v383
        %385 = vmax.xlane.f32.xlu0 %v384
        %v386 = vpop.xlane.xlu0 %385
        %v387 = vlaneseq
        %v388 = vand.u32 %v387, 127
        %vm389 = vcmp.eq.s32.totalorder %v388, 0
        %v390 = vsel %vm389, %v376, %v386
        %v391 = vld [vmem:[%s2] sm:$0x3]
        %v392 = vld [vmem:[%s3] sm:$0x3]
        %394 = vset.pattern.permute.xlu0 0
        %395 = vperm.xlu0 %394, %v392
        %v396 = vpop.permute.xlu0 %395
        %vm398 = vcmask 31744
        %v400 = vsel %vm398, %v391, 0
        %v403 = vsel %vm363, %v390, 0
        %405 = vmatpush.msra.mxu0 0.0
        %406 = vmatpush.msra.mxu0 0.0
        %407 = vmatpush.msra.mxu0 0.0
        %408 = vmatpush.msra.mxu0 0.0
        %409 = vmatpush.msra.mxu0 0.0
        %410 = vmatpush.msra.mxu0 0.0
        %411 = vmatpush.msra.mxu0 0.0
        %412 = vmatpush.msra.mxu0 0.0
        %413 = vmatpush.msra.mxu0 0.0
        %414 = vmatpush.msra.mxu0 0.0
        %415 = vmatpush.msra.mxu0 0.0
        %416 = vmatpush.msra.mxu0 0.0
        %417 = vmatpush.msra.mxu0 0.0
        %418 = vmatpush.msra.mxu0 0.0
        %419 = vmatpush.msra.mxu0 0.0
        %420 = vmatpush.msra.mxu0 %v403
        %421 = vmatmul.f32.gmra.mxu0 %v400
        %v422 = vpop.f32.mrf.mxu0
        %v423 = vadd.f32 %v396, %v422
        %424 = vdwg.mxu0
        %v425 = vmax.f32 %v423, 0.0
        %v426 = vld [vmem:[%s4] sm:$0xf]
        %v427 = vld [vmem:[%s5] sm:$0xf]
        %429 = vset.pattern.permute.xlu0 0
        %430 = vperm.xlu0 %429, %v427
        %v431 = vpop.permute.xlu0 %430
        %vm433 = vcmask 15360
        %v435 = vsel %vm433, %v426, 0
        %vm437 = vcmask 1041408
        %v439 = vsel %vm437, %v425, 0
        %441 = vmatpush.msra.mxu0 0.0
        %442 = vmatpush.msra.mxu0 0.0
        %443 = vmatpush.msra.mxu0 0.0
        %444 = vmatpush.msra.mxu0 0.0
        %445 = vmatpush.msra.mxu0 0.0
        %446 = vmatpush.msra.mxu0 0.0
        %447 = vmatpush.msra.mxu0 0.0
        %448 = vmatpush.msra.mxu0 0.0
        %449 = vmatpush.msra.mxu0 0.0
        %450 = vmatpush.msra.mxu0 0.0
        %451 = vmatpush.msra.mxu0 0.0
        %452 = vmatpush.msra.mxu0 0.0
        %453 = vmatpush.msra.mxu0 0.0
        %454 = vmatpush.msra.mxu0 0.0
        %455 = vmatpush.msra.mxu0 0.0
        %456 = vmatpush.msra.mxu0 %v439
        %457 = vmatmul.f32.gmra.mxu0 %v435
        %v458 = vpop.f32.mrf.mxu0
        %v459 = vadd.f32 %v431, %v458
        %460 = vdwg.mxu0
        %vm461 = vcmask 11264
        %v462 = vsel %vm461, %v459, 0.0
        %463 = vadd.xlane.f32.xlu0 %v462
        %v464 = vpop.xlane.xlu0 %463
        %v465 = vxor.u32 %v464, 2147483648
        %v466 = vmul.f32 %v465, 1.442695
        %v467 = vpow.pop %v466
        %v468 = vadd.f32 %v467, 1.0
        %v469 = vrcp.pop %v468
        %v470 = vmul.f32 %v468, %v469
        %v471 = vsub.f32 1.0, %v470
        %v472 = vmul.f32 %v469, %v471
        %v473 = vadd.f32 %v469, %v472
        %vm474 = vweird.f32 %v468
        %vm475 = vweird.f32 %v469
        %vm476 = vmor %vm474, %vm475
        %v477 = vsel %vm476, %v469, %v473
        %v478 = vand.u32 2147483647, %v468
        %vm479 = vcmp.eq.f32.partialorder %v478, 8.507059e+37
        %v480 = vand.u32 %v468, 2147483648
        %v481 = vor.u32 1.1754944e-38, %v480
        %v482 = vsel %vm479, %v481, %v477
        %v483 = vmul.f32 1.0, %v482
        %v486 = vunpack.c.l.s4 839922192
        %v487 = vunpack.c.0.s8 %v486
        %v488 = vperm.slane %v483, %v487
        %v490 = vmul.f32 %v356, %v488
        %492 = vst [vmem:[#allocation1] ss:$2 sm:$0xff] %v490
        %v493 = vld.sshfl [vmem:[#allocation1] sm:$0xff pattern:$0x75316420]
        %v494 = vld.sshfl [vmem:[#allocation1 + $0x8] sm:$0xff pattern:$0x75316420]
        %v497 = vsel %vm363, %v493, -inf
        %v498 = vrot.slane %v497, 4
        %v499 = vmax.f32 %v497, %v498
        %v500 = vrot.slane %v499, 2
        %v501 = vmax.f32 %v499, %v500
        %v502 = vrot.slane %v501, 1
        %v503 = vmax.f32 %v501, %v502
        %v504 = vsel %vm363, %v494, -inf
        %v505 = vrot.slane %v504, 4
        %v506 = vmax.f32 %v504, %v505
        %v507 = vrot.slane %v506, 2
        %v508 = vmax.f32 %v506, %v507
        %v509 = vrot.slane %v508, 1
        %v510 = vmax.f32 %v508, %v509
        %511 = vst [vmem:[#allocation1] ss:$2 sm:$0xff] %v490
        %v512 = vld.sshfl [vmem:[#allocation1] sm:$0xff pattern:$0x75316420]
        %v513 = vld.sshfl [vmem:[#allocation1 + $0x8] sm:$0xff pattern:$0x75316420]
        %v516 = vsel %vm363, %v512, 0.0
        %v517 = vrot.slane %v516, 4
        %v518 = vadd.f32 %v516, %v517
        %v519 = vrot.slane %v518, 2
        %v520 = vadd.f32 %v518, %v519
        %v521 = vrot.slane %v520, 1
        %v522 = vadd.f32 %v520, %v521
        %v523 = vsel %vm363, %v513, 0.0
        %v524 = vrot.slane %v523, 4
        %v525 = vadd.f32 %v523, %v524
        %v526 = vrot.slane %v525, 2
        %v527 = vadd.f32 %v525, %v526
        %v528 = vrot.slane %v527, 1
        %v529 = vadd.f32 %v527, %v528
        %v530 = vrcp.pop 4.0
        %v531 = vmul.f32 4.0, %v530
        %v532 = vsub.f32 1.0, %v531
        %v533 = vmul.f32 %v530, %v532
        %v534 = vadd.f32 %v530, %v533
        %vm535 = vweird.f32 %v530
        %v536 = vsel %vm535, %v530, %v534
        %v537 = vmul.f32 %v522, %v536
        %v538 = vmul.f32 %v529, %v536
        %s539 = sld [smem:[#allocation2]]
        %v540 = vstv %s539
        %v541 = vadd.f32 %v540, 0.0
        %s542 = sld [smem:[#allocation9]]
        %s543 = sld [smem:[#allocation9 + $0x9]]
        %544 = vrot.lane.b32.xlu0 %v503, 17
        %v545 = vpop.permute.xlu0 %544
        %546 = vrot.lane.b32.xlu0 %v510, 17
        %v547 = vpop.permute.xlu0 %546
        %vm548 = vcmp.lt.s32.totalorder %v388, 17
        %v549 = vsel %vm548, %v545, %v547
        %v550 = vsel %vm548, %v547, %v545
        %551 = vrot.lane.b32.xlu0 %v537, 17
        %v552 = vpop.permute.xlu0 %551
        %553 = vrot.lane.b32.xlu0 %v538, 17
        %v554 = vpop.permute.xlu0 %553
        %v555 = vsel %vm548, %v552, %v554
        %v556 = vsel %vm548, %v554, %v552
        %v557 = vstv %s542
        %v558 = vmul.f32 %v557, %v550
        %v559 = vmul.f32 %v557, %v549
        %v560 = vstv %s543
        %v561 = vmul.f32 %v560, %v556
        %v562 = vmul.f32 %v560, %v555
        %v563 = vadd.f32 %v558, %v561
        %v564 = vadd.f32 %v559, %v562
        %v565 = vld [vmem:[#allocation7] ss:$8 sm:$0x3]
        %vm566 = vcmp.ne.f32.partialorder %v565, 0.0
        %v569 = vrot.slane %v564, 7
        %vm570 = vcmask 1040384
        %v571 = vsel %vm570, %v563, %v569
        %v573 = vsel %vm566, %v571, 0.0
        %v574 = vadd.f32 %v541, %v573
        %s575 = sld [smem:[#allocation9 + $0x1]]
        %s576 = sld [smem:[#allocation9 + $0xa]]
        %577 = vrot.lane.b32.xlu0 %v503, 16
        %v578 = vpop.permute.xlu0 %577
        %579 = vrot.lane.b32.xlu0 %v510, 16
        %v580 = vpop.permute.xlu0 %579
        %vm581 = vcmp.lt.s32.totalorder %v388, 16
        %v582 = vsel %vm581, %v578, %v580
        %v583 = vsel %vm581, %v580, %v578
        %584 = vrot.lane.b32.xlu0 %v537, 16
        %v585 = vpop.permute.xlu0 %584
        %586 = vrot.lane.b32.xlu0 %v538, 16
        %v587 = vpop.permute.xlu0 %586
        %v588 = vsel %vm581, %v585, %v587
        %v589 = vsel %vm581, %v587, %v585
        %v590 = vstv %s575
        %v591 = vmul.f32 %v590, %v583
        %v592 = vmul.f32 %v590, %v582
        %v593 = vstv %s576
        %v594 = vmul.f32 %v593, %v589
        %v595 = vmul.f32 %v593, %v588
        %v596 = vadd.f32 %v591, %v594
        %v597 = vadd.f32 %v592, %v595
        %s598 = scalar_lea.vmem [#allocation7], 1
        %v599 = vld [vmem:[%s598] ss:$8 sm:$0x3]
        %vm600 = vcmp.ne.f32.partialorder %v599, 0.0
        %v603 = vrot.slane %v597, 7
        %v604 = vsel %vm570, %v596, %v603
        %v606 = vsel %vm600, %v604, 0.0
        %v607 = vadd.f32 %v574, %v606
        %s608 = sld [smem:[#allocation9 + $0x2]]
        %s609 = sld [smem:[#allocation9 + $0xb]]
        %610 = vrot.lane.b32.xlu0 %v503, 15
        %v611 = vpop.permute.xlu0 %610
        %612 = vrot.lane.b32.xlu0 %v510, 15
        %v613 = vpop.permute.xlu0 %612
        %vm614 = vcmp.lt.s32.totalorder %v388, 15
        %v615 = vsel %vm614, %v611, %v613
        %v616 = vsel %vm614, %v613, %v611
        %617 = vrot.lane.b32.xlu0 %v537, 15
        %v618 = vpop.permute.xlu0 %617
        %619 = vrot.lane.b32.xlu0 %v538, 15
        %v620 = vpop.permute.xlu0 %619
        %v621 = vsel %vm614, %v618, %v620
        %v622 = vsel %vm614, %v620, %v618
        %v623 = vstv %s608
        %v624 = vmul.f32 %v623, %v616
        %v625 = vmul.f32 %v623, %v615
        %v626 = vstv %s609
        %v627 = vmul.f32 %v626, %v622
        %v628 = vmul.f32 %v626, %v621
        %v629 = vadd.f32 %v624, %v627
        %v630 = vadd.f32 %v625, %v628
        %s631 = scalar_lea.vmem [#allocation7], 2
        %v632 = vld [vmem:[%s631] ss:$8 sm:$0x3]
        %vm633 = vcmp.ne.f32.partialorder %v632, 0.0
        %v636 = vrot.slane %v630, 7
        %v637 = vsel %vm570, %v629, %v636
        %v639 = vsel %vm633, %v637, 0.0
        %v640 = vadd.f32 %v607, %v639
        %s641 = sld [smem:[#allocation9 + $0x3]]
        %s642 = sld [smem:[#allocation9 + $0xc]]
        %643 = vrot.lane.b32.xlu0 %v503, 1
        %v644 = vpop.permute.xlu0 %643
        %645 = vrot.lane.b32.xlu0 %v510, 1
        %v646 = vpop.permute.xlu0 %645
        %vm647 = vcmp.lt.s32.totalorder %v388, 1
        %v648 = vsel %vm647, %v644, %v646
        %v649 = vsel %vm647, %v646, %v644
        %650 = vrot.lane.b32.xlu0 %v537, 1
        %v651 = vpop.permute.xlu0 %650
        %652 = vrot.lane.b32.xlu0 %v538, 1
        %v653 = vpop.permute.xlu0 %652
        %v654 = vsel %vm647, %v651, %v653
        %v655 = vsel %vm647, %v653, %v651
        %v656 = vstv %s641
        %v657 = vmul.f32 %v656, %v649
        %v658 = vmul.f32 %v656, %v648
        %v659 = vstv %s642
        %v660 = vmul.f32 %v659, %v655
        %v661 = vmul.f32 %v659, %v654
        %v662 = vadd.f32 %v657, %v660
        %v663 = vadd.f32 %v658, %v661
        %s664 = scalar_lea.vmem [#allocation7], 3
        %v665 = vld [vmem:[%s664] ss:$8 sm:$0x3]
        %vm666 = vcmp.ne.f32.partialorder %v665, 0.0
        %v669 = vrot.slane %v663, 7
        %v670 = vsel %vm570, %v662, %v669
        %v672 = vsel %vm666, %v670, 0.0
        %v673 = vadd.f32 %v640, %v672
        %s674 = sld [smem:[#allocation9 + $0x4]]
        %s675 = sld [smem:[#allocation9 + $0xd]]
        %v676 = vstv %s674
        %v677 = vmul.f32 %v676, %v503
        %v678 = vmul.f32 %v676, %v510
        %v681 = vrot.slane %v678, 7
        %v682 = vsel %vm570, %v677, %v681
        %v684 = vadd.f32 %v673, %v682
        %v685 = vstv %s675
        %v686 = vmul.f32 %v685, %v537
        %v687 = vmul.f32 %v685, %v538
        %v690 = vrot.slane %v687, 7
        %v691 = vsel %vm570, %v686, %v690
        %v693 = vadd.f32 %v684, %v691
        %s694 = sld [smem:[#allocation9 + $0x5]]
        %s695 = sld [smem:[#allocation9 + $0xe]]
        %696 = vrot.lane.b32.xlu0 %v503, 127
        %v697 = vpop.permute.xlu0 %696
        %698 = vrot.lane.b32.xlu0 %v510, 127
        %v699 = vpop.permute.xlu0 %698
        %vm700 = vcmp.lt.s32.totalorder %v388, 127
        %v701 = vsel %vm700, %v697, %v699
        %v702 = vsel %vm700, %v699, %v697
        %703 = vrot.lane.b32.xlu0 %v537, 127
        %v704 = vpop.permute.xlu0 %703
        %705 = vrot.lane.b32.xlu0 %v538, 127
        %v706 = vpop.permute.xlu0 %705
        %v707 = vsel %vm700, %v704, %v706
        %v708 = vsel %vm700, %v706, %v704
        %v709 = vstv %s694
        %v710 = vmul.f32 %v709, %v701
        %v711 = vmul.f32 %v709, %v702
        %v712 = vstv %s695
        %v713 = vmul.f32 %v712, %v707
        %v714 = vmul.f32 %v712, %v708
        %v715 = vadd.f32 %v710, %v713
        %v716 = vadd.f32 %v711, %v714
        %s717 = scalar_lea.vmem [#allocation7], 5
        %v718 = vld [vmem:[%s717] ss:$8 sm:$0x3]
        %vm719 = vcmp.ne.f32.partialorder %v718, 0.0
        %v722 = vrot.slane %v716, 7
        %v723 = vsel %vm570, %v715, %v722
        %v725 = vsel %vm719, %v723, 0.0
        %v726 = vadd.f32 %v693, %v725
        %s727 = sld [smem:[#allocation9 + $0x6]]
        %s728 = sld [smem:[#allocation9 + $0xf]]
        %729 = vrot.lane.b32.xlu0 %v503, 113
        %v730 = vpop.permute.xlu0 %729
        %731 = vrot.lane.b32.xlu0 %v510, 113
        %v732 = vpop.permute.xlu0 %731
        %vm733 = vcmp.lt.s32.totalorder %v388, 113
        %v734 = vsel %vm733, %v730, %v732
        %v735 = vsel %vm733, %v732, %v730
        %736 = vrot.lane.b32.xlu0 %v537, 113
        %v737 = vpop.permute.xlu0 %736
        %738 = vrot.lane.b32.xlu0 %v538, 113
        %v739 = vpop.permute.xlu0 %738
        %v740 = vsel %vm733, %v737, %v739
        %v741 = vsel %vm733, %v739, %v737
        %v742 = vstv %s727
        %v743 = vmul.f32 %v742, %v734
        %v744 = vmul.f32 %v742, %v735
        %v745 = vstv %s728
        %v746 = vmul.f32 %v745, %v740
        %v747 = vmul.f32 %v745, %v741
        %v748 = vadd.f32 %v743, %v746
        %v749 = vadd.f32 %v744, %v747
        %s750 = scalar_lea.vmem [#allocation7], 6
        %v751 = vld [vmem:[%s750] ss:$8 sm:$0x3]
        %vm752 = vcmp.ne.f32.partialorder %v751, 0.0
        %v755 = vrot.slane %v749, 7
        %v756 = vsel %vm570, %v748, %v755
        %v758 = vsel %vm752, %v756, 0.0
        %v759 = vadd.f32 %v726, %v758
        %s760 = sld [smem:[#allocation9 + $0x7]]
        %s761 = sld [smem:[#allocation9 + $0x10]]
        %762 = vrot.lane.b32.xlu0 %v503, 112
        %v763 = vpop.permute.xlu0 %762
        %764 = vrot.lane.b32.xlu0 %v510, 112
        %v765 = vpop.permute.xlu0 %764
        %vm766 = vcmp.lt.s32.totalorder %v388, 112
        %v767 = vsel %vm766, %v763, %v765
        %v768 = vsel %vm766, %v765, %v763
        %769 = vrot.lane.b32.xlu0 %v537, 112
        %v770 = vpop.permute.xlu0 %769
        %771 = vrot.lane.b32.xlu0 %v538, 112
        %v772 = vpop.permute.xlu0 %771
        %v773 = vsel %vm766, %v770, %v772
        %v774 = vsel %vm766, %v772, %v770
        %v775 = vstv %s760
        %v776 = vmul.f32 %v775, %v767
        %v777 = vmul.f32 %v775, %v768
        %v778 = vstv %s761
        %v779 = vmul.f32 %v778, %v773
        %v780 = vmul.f32 %v778, %v774
        %v781 = vadd.f32 %v776, %v779
        %v782 = vadd.f32 %v777, %v780
        %s783 = scalar_lea.vmem [#allocation7], 7
        %v784 = vld [vmem:[%s783] ss:$8 sm:$0x3]
        %vm785 = vcmp.ne.f32.partialorder %v784, 0.0
        %v788 = vrot.slane %v782, 7
        %v789 = vsel %vm570, %v781, %v788
        %v791 = vsel %vm785, %v789, 0.0
        %v792 = vadd.f32 %v759, %v791
        %s793 = sld [smem:[#allocation9 + $0x8]]
        %s794 = sld [smem:[#allocation9 + $0x11]]
        %795 = vrot.lane.b32.xlu0 %v503, 111
        %v796 = vpop.permute.xlu0 %795
        %797 = vrot.lane.b32.xlu0 %v510, 111
        %v798 = vpop.permute.xlu0 %797
        %vm799 = vcmp.lt.s32.totalorder %v388, 111
        %v800 = vsel %vm799, %v796, %v798
        %v801 = vsel %vm799, %v798, %v796
        %802 = vrot.lane.b32.xlu0 %v537, 111
        %v803 = vpop.permute.xlu0 %802
        %804 = vrot.lane.b32.xlu0 %v538, 111
        %v805 = vpop.permute.xlu0 %804
        %v806 = vsel %vm799, %v803, %v805
        %v807 = vsel %vm799, %v805, %v803
        %v808 = vstv %s793
        %v809 = vmul.f32 %v808, %v800
        %v810 = vmul.f32 %v808, %v801
        %v811 = vstv %s794
        %v812 = vmul.f32 %v811, %v806
        %v813 = vmul.f32 %v811, %v807
        %v814 = vadd.f32 %v809, %v812
        %v815 = vadd.f32 %v810, %v813
        %s816 = scalar_lea.vmem [#allocation7], 16
        %v817 = vld [vmem:[%s816] ss:$8 sm:$0x3]
        %vm818 = vcmp.ne.f32.partialorder %v817, 0.0
        %v821 = vrot.slane %v815, 7
        %v822 = vsel %vm570, %v814, %v821
        %v824 = vsel %vm818, %v822, 0.0
        %v825 = vadd.f32 %v792, %v824
        %v826 = vxor.u32 %v825, 2147483648
        %v827 = vmul.f32 %v826, 1.442695
        %v828 = vpow.pop %v827
        %v829 = vadd.f32 %v828, 1.0
        %v830 = vrcp.pop %v829
        %v831 = vmul.f32 %v829, %v830
        %v832 = vsub.f32 1.0, %v831
        %v833 = vmul.f32 %v830, %v832
        %v834 = vadd.f32 %v830, %v833
        %vm835 = vweird.f32 %v829
        %vm836 = vweird.f32 %v830
        %vm837 = vmor %vm835, %vm836
        %v838 = vsel %vm837, %v830, %v834
        %v839 = vand.u32 2147483647, %v829
        %vm840 = vcmp.eq.f32.partialorder %v839, 8.507059e+37
        %v841 = vand.u32 %v829, 2147483648
        %v842 = vor.u32 1.1754944e-38, %v841
        %v843 = vsel %vm840, %v842, %v838
        %v844 = vmul.f32 1.0, %v843
        %v846 = vperm.slane %v844, 0
        %v847 = vperm.slane %v844, 1
        %v848 = vrot.slane %v847, 4
        %v849 = vsel %vm363, %v846, %v848
        %v851 = vmul.f32 %v490, %v849
        %852 = vst [vmem:[%s355] sm:$0xff] %v851
        %s853 = sand.u32 %s209, 1
        %s854 = scalar_lea.sflag [#allocation5], %s853
        %s855 = sand.u32 %s209, 1
        %s856 = smul.addr %s855, 8
        %s857 = scalar_lea.vmem [#allocation10], %s856
        // Predicated region
        $region65: #{tpu_custom_call.1} parent=51 // pred_check
          %p858 = pneg %p219
        $region66: #{tpu_custom_call.1} parent=51 // pred_check_branch
          %860 = sbr.rel (%p858) target = $region68
        $region67: #{tpu_custom_call.1} parent=51 // pred_region
          %862 = vsyncadd %s854, 0
          %s863 = smul.addr %s28, 2
          %s864 = smul.addr %s863, 4
          %s865 = scalar_lea.hbm %s8, %s864
          %s867 = sshll.u32 %s857, 4
          %s868 = int_to_ptr.vmem [resolvable:$true] %s867
          %s869 = sshll.u32 %s865, 4
          %s870 = int_to_ptr.hbm [resolvable:$true] %s869
          %872 = dma.vmem_to_hbm [thread:$0]  %s868, 128, %s870, %s854
        $region68: #{tpu_custom_call.1} parent=51 // pred_fallthru
          _
      $region52: #{tpu_custom_call.1} parent=5 // pred_fallthru
        _
      %p873 = scmp.le.s32.totalorder 2, %s23
      // Predicated region
      $region69: #{tpu_custom_call.1} parent=5 // pred_check
        %p874 = pneg %p873
      $region70: #{tpu_custom_call.1} parent=5 // pred_check_branch
        %876 = sbr.rel (%p874) target = $region72
      $region71: #{tpu_custom_call.1} parent=5 // pred_region
        %s877 = ssub.s32 %s23, 2
        // Predicated region
        $region73: #{tpu_custom_call.1} parent=71 // pred_check
          %p878 = pneg %p225
        $region74: #{tpu_custom_call.1} parent=71 // pred_check_branch
          %880 = sbr.rel (%p878) target = $region76
        $region75: #{tpu_custom_call.1} parent=71 // pred_region
          %s881 = sand.u32 %s210, 1
          %s882 = scalar_lea.sflag [#allocation5], %s881
          %s883 = sand.u32 %s210, 1
          %s884 = smul.addr %s883, 8
          %s885 = scalar_lea.vmem [#allocation10], %s884
          %887 = dma.done %s882, 128
        $region76: #{tpu_custom_call.1} parent=71 // pred_fallthru
          _
      $region72: #{tpu_custom_call.1} parent=5 // pred_fallthru
        _
    $region6: #{tpu_custom_call.1} parent=1 // loop_footer
      %s27 = sadd.s32 1, %s23
    $region7: #{tpu_custom_call.1} parent=1 // loop_footer_branch
      %22 = sbr.rel target = $region3
    $region8: #{tpu_custom_call.1} parent=1 // loop_exit
      _
    %888 = vsyncpa [#allocation4], 1
    %s889 = scalar_lea.sflag [#allocation4], 1
    %890 = vsyncpa %s889, 1
    %891 = vsyncpa [#allocation8], 1
    %892 = vsyncpa [#allocation5], 1
    %s893 = scalar_lea.sflag [#allocation5], 1
    %894 = vsyncpa %s893, 1
    %895 = vsyncpa [#allocation6], 1
    %s896 = scalar_lea.sflag [#allocation6], 1
    %897 = vsyncpa %s896, 1

</llo_original>
